<compile_context>
chip_gen: v7x
topology: tpu7x:2x2x1
jax: 0.10.0
libtpu: 0.0.40
codegen_flags: <defaults>
</compile_context>

<pallas_src>
import functools

import jax
import jax.numpy as jnp
from jax.experimental import pallas as pl
from jax.experimental.pallas import tpu as pltpu


def _round_up(a: int, b: int) -> int:
    return ((a + b - 1) // b) * b


# Per-weight-tile VMEM budget (bytes).  Double-buffered by BlockSpec, so the
# pipeline uses 2x this; 8 MiB keeps us well inside the scoped VMEM default
# on every generation (v5e 16 MiB default is raised below, v6e/v7x 32 MiB).
_W_TILE_BUDGET_BYTES = 8 * 1024 * 1024


def _logreg_kernel(x_ref, w_ref, b_ref, o_ref):
    # x_ref : (1, tk)          f32 VMEM (streamed over K)
    # w_ref : (n_out, tk)      f32 VMEM (streamed over K, native Linear layout)
    # b_ref : (1, n_out)       f32 VMEM (resident)
    # o_ref : (1, n_out)       f32 VMEM (resident accumulator AND output)
    k = pl.program_id(0)

    @pl.when(k == 0)
    def _init():
        o_ref[...] = jnp.zeros_like(o_ref)

    # Row-vector x (1, tk) contracted against weight (n_out, tk) on the K
    # (lane) axis -> partial logits (1, n_out), accumulated in f32 directly
    # in the resident output block.
    o_ref[...] += jax.lax.dot_general(
        x_ref[...],
        w_ref[...],
        dimension_numbers=(((1,), (1,)), ((), ())),
        preferred_element_type=jnp.float32,
    )

    @pl.when(k == pl.num_programs(0) - 1)
    def _finalize():
        logits = o_ref[...] + b_ref[...]
        # Numerically stable softmax(dim=-1), exact normalization.
        m = jnp.max(logits, axis=-1, keepdims=True)
        e = jnp.exp(logits - m)
        denom = jnp.sum(e, axis=-1, keepdims=True)
        o_ref[...] = (e / denom).astype(o_ref.dtype)


@jax.jit
def logreg_net_forward(x, weight, bias):
    """Pallas equivalent of LogRegNet.forward.

    x      : arbitrary-shaped float array (flattened to n_inputs elements,
             exactly like torch.flatten(x))
    weight : (n_outputs, n_inputs) float32  (PyTorch nn.Linear convention)
    bias   : (n_outputs,) float32
    returns: (n_outputs,) float32 softmax probabilities
    """
    n_outputs, n_inputs = weight.shape
    x_flat = jnp.reshape(x, (1, n_inputs)).astype(weight.dtype)
    b = jnp.reshape(bias, (1, n_outputs)).astype(jnp.float32)

    dtype_bytes = jnp.dtype(weight.dtype).itemsize
    max_tk = _W_TILE_BUDGET_BYTES // (n_outputs * dtype_bytes)

    if max_tk >= n_inputs:
        # Whole weight in one block: block == full array dims (no (8,128)
        # divisibility requirement, no padding, one contiguous DMA).
        tk = n_inputs
        num_k = 1
        x_in, w_in = x_flat, weight
    else:
        # Large-K fallback: multi-MiB K tiles (rows stay contiguous chunks of
        # tk*4 bytes each >> 4 KiB, so DMA efficiency is fine).
        tk = max(128, (max_tk // 128) * 128)
        k_pad = _round_up(n_inputs, tk)
        if k_pad != n_inputs:
            # Zero K-padding contributes nothing to the logits.
            x_in = jnp.pad(x_flat, ((0, 0), (0, k_pad - n_inputs)))
            w_in = jnp.pad(weight, ((0, 0), (0, k_pad - n_inputs)))
        else:
            x_in, w_in = x_flat, weight
        num_k = k_pad // tk

    out = pl.pallas_call(
        _logreg_kernel,
        out_shape=jax.ShapeDtypeStruct((1, n_outputs), jnp.float32),
        grid_spec=pltpu.PrefetchScalarGridSpec(
            num_scalar_prefetch=0,
            grid=(num_k,),
            in_specs=[
                pl.BlockSpec((1, tk), lambda k: (0, k)),           # x chunk
                pl.BlockSpec((n_outputs, tk), lambda k: (0, k)),   # W chunk (native layout)
                pl.BlockSpec((1, n_outputs), lambda k: (0, 0)),    # bias (resident)
            ],
            out_specs=pl.BlockSpec((1, n_outputs), lambda k: (0, 0)),
        ),
        compiler_params=pltpu.CompilerParams(
            # K is a reduction axis with a resident output -> "arbitrary".
            dimension_semantics=("arbitrary",),
            # 2 x 8 MiB double-buffered weight tiles + small resident blocks;
            # explicit limit keeps v5e (16 MiB scoped default) happy and is
            # well under v7x's 64 MiB physical VMEM.
            vmem_limit_bytes=32 * 1024 * 1024,
        ),
    )(x_in, w_in, b)

    # torch.flatten(x) makes the module output a 1-D vector.
    return out[0]


if __name__ == "__main__":
    # Small shapes consistent with the module: an "image" that gets fully
    # flattened (batch dim included, as torch.flatten does) into the
    # logistic-regression input vector.
    batch, channels, spatial = 2, 4, 16
    x_shape = (batch, channels, spatial, spatial)
    n_inputs = batch * channels * spatial * spatial   # 2048
    n_outputs = 32

    key = jax.random.PRNGKey(0)
    kx, kw, kb = jax.random.split(key, 3)

    x = jax.random.normal(kx, x_shape, dtype=jnp.float32)
    # Deterministic init mimicking nn.Linear default: U(-1/sqrt(fan_in), 1/sqrt(fan_in))
    bound = 1.0 / jnp.sqrt(jnp.float32(n_inputs))
    weight = jax.random.uniform(
        kw, (n_outputs, n_inputs), minval=-bound, maxval=bound, dtype=jnp.float32
    )
    bias = jax.random.uniform(
        kb, (n_outputs,), minval=-bound, maxval=bound, dtype=jnp.float32
    )

    probs = logreg_net_forward(x, weight, bias)
    probs = jax.block_until_ready(probs)

    # Cross-check against a pure-JAX f32 reference of the PyTorch forward.
    ref = jax.nn.softmax(weight @ jnp.reshape(x, (-1,)) + bias, axis=-1)
    assert probs.shape == (n_outputs,)
    assert jnp.allclose(probs, ref, atol=1e-5, rtol=1e-4)
    assert jnp.allclose(jnp.sum(probs), 1.0, atol=1e-5)

    print("KERNEL_OK")
</pallas_src>

<mosaic_0001>
module attributes {stable_mosaic.version = 11 : i64} {
  func.func @_logreg_kernel(%arg0: i32, %arg1: memref<1x2048xf32, #tpu.memory_space<vmem>>, %arg2: memref<32x2048xf32, #tpu.memory_space<vmem>>, %arg3: memref<1x32xf32, #tpu.memory_space<vmem>>, %arg4: memref<1x32xf32, #tpu.memory_space<vmem>>) attributes {dimension_semantics = [#tpu.dimension_semantics<arbitrary>], iteration_bounds = array<i64: 1>, scalar_prefetch = 0 : i64, scratch_operands = 0 : i64, tpu.core_type = #tpu.core_type<tc>, window_params = [{transform_indices = @transform_0, window_bounds = array<i64: 1, 2048>}, {transform_indices = @transform_1, window_bounds = array<i64: 32, 2048>}, {pipeline_mode = #tpu.pipeline_mode<synchronous>, transform_indices = @transform_2, window_bounds = array<i64: 1, 32>}, {pipeline_mode = #tpu.pipeline_mode<synchronous>, transform_indices = @transform_3, window_bounds = array<i64: 1, 32>}]} {
    %c0_i32 = arith.constant 0 : i32
    %0 = arith.cmpi eq, %arg0, %c0_i32 : i32
    %1 = arith.extui %0 : i1 to i32
    %c0_i32_0 = arith.constant 0 : i32
    %2 = arith.cmpi ne, %1, %c0_i32_0 : i32
    scf.if %2 {
      %cst_10 = arith.constant 0.000000e+00 : f32
      %12 = vector.broadcast %cst_10 : f32 to vector<1x32xf32>
      %c0_11 = arith.constant 0 : index
      %c0_12 = arith.constant 0 : index
      %13 = vector.load %arg4[%c0_11, %c0_12] : memref<1x32xf32, #tpu.memory_space<vmem>>, vector<1x32xf32>
      tpu.vector_store %arg4[%c0_11, %c0_12], %12 {strides = array<i32>} : memref<1x32xf32, #tpu.memory_space<vmem>>, vector<1x32xf32>,
    } else {
    }
    %c0 = arith.constant 0 : index
    %c0_1 = arith.constant 0 : index
    %3 = vector.load %arg4[%c0, %c0_1] : memref<1x32xf32, #tpu.memory_space<vmem>>, vector<1x32xf32>
    %c0_2 = arith.constant 0 : index
    %c0_3 = arith.constant 0 : index
    %4 = vector.load %arg1[%c0_2, %c0_3] : memref<1x2048xf32, #tpu.memory_space<vmem>>, vector<1x2048xf32>
    %c0_4 = arith.constant 0 : index
    %c0_5 = arith.constant 0 : index
    %5 = vector.load %arg2[%c0_4, %c0_5] : memref<32x2048xf32, #tpu.memory_space<vmem>>, vector<32x2048xf32>
    %cst = arith.constant dense<0.000000e+00> : vector<1x32xf32>
    %6 = tpu.matmul %4, %5, %cst {dimension_numbers = #tpu.dot_dimension_numbers<[1], [1], [0], [0], [0, 0, 1, 0], [], []>} : vector<1x2048xf32>, vector<32x2048xf32>, vector<1x32xf32> -> vector<1x32xf32>
    %7 = arith.addf %3, %6 : vector<1x32xf32>
    %c0_6 = arith.constant 0 : index
    %c0_7 = arith.constant 0 : index
    %8 = vector.load %arg4[%c0_6, %c0_7] : memref<1x32xf32, #tpu.memory_space<vmem>>, vector<1x32xf32>
    tpu.vector_store %arg4[%c0_6, %c0_7], %7 {strides = array<i32>} : memref<1x32xf32, #tpu.memory_space<vmem>>, vector<1x32xf32>,
    %c0_i32_8 = arith.constant 0 : i32
    %9 = arith.cmpi eq, %arg0, %c0_i32_8 : i32
    %10 = arith.extui %9 : i1 to i32
    %c0_i32_9 = arith.constant 0 : i32
    %11 = arith.cmpi ne, %10, %c0_i32_9 : i32
    scf.if %11 {
      %c0_10 = arith.constant 0 : index
      %c0_11 = arith.constant 0 : index
      %12 = vector.load %arg4[%c0_10, %c0_11] : memref<1x32xf32, #tpu.memory_space<vmem>>, vector<1x32xf32>
      %c0_12 = arith.constant 0 : index
      %c0_13 = arith.constant 0 : index
      %13 = vector.load %arg3[%c0_12, %c0_13] : memref<1x32xf32, #tpu.memory_space<vmem>>, vector<1x32xf32>
      %14 = arith.addf %12, %13 : vector<1x32xf32>
      %cst_14 = arith.constant dense<0xFF800000> : vector<1xf32>
      %15 = vector.multi_reduction <maximumf>, %14, %cst_14 [1] : vector<1x32xf32> to vector<1xf32>
      %16 = vector.shape_cast %15 : vector<1xf32> to vector<1x1xf32>
      %17 = vector.broadcast %16 : vector<1x1xf32> to vector<1x32xf32>
      %18 = arith.subf %14, %17 : vector<1x32xf32>
      %19 = math.exp %18 : vector<1x32xf32>
      %cst_15 = arith.constant dense<0.000000e+00> : vector<1xf32>
      %20 = vector.multi_reduction <add>, %19, %cst_15 [1] : vector<1x32xf32> to vector<1xf32>
      %21 = vector.shape_cast %20 : vector<1xf32> to vector<1x1xf32>
      %22 = vector.broadcast %21 : vector<1x1xf32> to vector<1x32xf32>
      %23 = arith.divf %19, %22 : vector<1x32xf32>
      %c0_16 = arith.constant 0 : index
      %c0_17 = arith.constant 0 : index
      %24 = vector.load %arg4[%c0_16, %c0_17] : memref<1x32xf32, #tpu.memory_space<vmem>>, vector<1x32xf32>
      tpu.vector_store %arg4[%c0_16, %c0_17], %23 {strides = array<i32>} : memref<1x32xf32, #tpu.memory_space<vmem>>, vector<1x32xf32>,
    } else {
    }
    return
  }
  func.func @transform_0(%arg0: i32) -> (i32, i32) {
    %c0_i32 = arith.constant 0 : i32
    %c0_i32_0 = arith.constant 0 : i32
    return %c0_i32, %arg0 : i32, i32
  }
  func.func @transform_1(%arg0: i32) -> (i32, i32) {
    %c0_i32 = arith.constant 0 : i32
    %c0_i32_0 = arith.constant 0 : i32
    return %c0_i32, %arg0 : i32, i32
  }
  func.func @transform_2(%arg0: i32) -> (i32, i32) {
    %c0_i32 = arith.constant 0 : i32
    %c0_i32_0 = arith.constant 0 : i32
    %c0_i32_1 = arith.constant 0 : i32
    return %c0_i32, %c0_i32_0 : i32, i32
  }
  func.func @transform_3(%arg0: i32) -> (i32, i32) {
    %c0_i32 = arith.constant 0 : i32
    %c0_i32_0 = arith.constant 0 : i32
    %c0_i32_1 = arith.constant 0 : i32
    return %c0_i32, %c0_i32_0 : i32, i32
  }
}

</mosaic_0001>

<llo_original>
// kernel: logreg_net_forward.1
$region0: #{logreg_net_forward.1}
  #allocation0 [shape = 'u32[]', space=smem, size = 0x4, offset = 0x4, fixed_abs, tag = 'smem constant byte address 0x4 - core index']
  #allocation1 [shape = 'u32[144,128]{1,0:T(1,128)}', space=vmem, size = 0x12000, scoped, tag = 'internal scratch']
  %s0 = inlined_call_operand.vmem [shape: f32[1,2048], index: 0, kind: input, shape index: {}]
  %s1 = inlined_call_operand.hbm [shape: f32[32,2048], index: 1, kind: input, shape index: {}]
  %s2 = inlined_call_operand.vmem [shape: f32[1,32], index: 2, kind: input, shape index: {}]
  %s3 = inlined_call_operand.hbm [shape: f32[1,32], index: 3, kind: output, shape index: {}]
  %s4 = sld [smem:[#allocation0]]
  $region34: #{logreg_net_forward.1} parent=0
    _
  %s6 = ssub.s32 1, %s4
  %s7 = scalar_select 0, %s6, %s4
  $region1: #{logreg_net_forward.1} parent=0
    #allocation2 [shape = 'u8[262144]{0}', space=vmem, size = 0x40000, scoped, tag = 'input window, operand 1, single buffered']
    #allocation3 [shape = 's32[1]{0}', space=sflag, size = 0x4, scoped, tag = 'scoped memory for logreg_net_forward.1']
    #allocation4 [shape = 's32[1]{0}', space=sflag, size = 0x4, scoped, tag = 'scoped memory for logreg_net_forward.1']
    #allocation5 [shape = 'u8[512]{0}', space=vmem, size = 0x400, scoped, tag = 'output window, operand 0, single buffered']
    %8 = vsyncpa [#allocation3], 0
    %9 = vsyncpa [#allocation4], 0
    // Predicated region
    $region2: #{logreg_net_forward.1} parent=1 // pred_check
      _
    $region3: #{logreg_net_forward.1} parent=1 // pred_check_branch
      %11 = sbr.rel (0) target = $region5
    $region4: #{logreg_net_forward.1} parent=1 // pred_region
      _
    $region5: #{logreg_net_forward.1} parent=1 // pred_fallthru
      _
    // Predicated region
    $region6: #{logreg_net_forward.1} parent=1 // pred_check
      _
    $region7: #{logreg_net_forward.1} parent=1 // pred_check_branch
      %13 = sbr.rel (0) target = $region9
    $region8: #{logreg_net_forward.1} parent=1 // pred_region
      %s15 = ssub.s32 8192, 8192
      %16 = vsyncadd [#allocation3], %s15
      %s17 = sshll.u32 [#allocation2], 4
      %s18 = int_to_ptr.vmem [resolvable:$true] %s17
      %23 = dma.hbm_to_vmem [thread:$0]  %s1, 8192, %s18, [#allocation3], 2048, 2048, 128
    $region9: #{logreg_net_forward.1} parent=1 // pred_fallthru
      _
    // Predicated region
    $region10: #{logreg_net_forward.1} parent=1 // pred_check
      _
    $region11: #{logreg_net_forward.1} parent=1 // pred_check_branch
      %25 = sbr.rel (0) target = $region13
    $region12: #{logreg_net_forward.1} parent=1 // pred_region
      _
    $region13: #{logreg_net_forward.1} parent=1 // pred_fallthru
      _
    // Predicated region
    $region14: #{logreg_net_forward.1} parent=1 // pred_check
      _
    $region15: #{logreg_net_forward.1} parent=1 // pred_check_branch
      %27 = sbr.rel (0) target = $region17
    $region16: #{logreg_net_forward.1} parent=1 // pred_region
      %28 = dma.done [#allocation3], 8192
    $region17: #{logreg_net_forward.1} parent=1 // pred_fallthru
      _
    %p29 = scmp.eq.s32.totalorder 0, 0
    // Predicated region
    $region18: #{logreg_net_forward.1} parent=1 // pred_check
      %p30 = pneg %p29
    $region19: #{logreg_net_forward.1} parent=1 // pred_check_branch
      %32 = sbr.rel (%p30) target = $region21
    $region20: #{logreg_net_forward.1} parent=1 // pred_region
      %vm33 = vcmask 253952
      %34 = vst.msk [vmem:[#allocation5] sm:$0x1] %vm33, 0.0
    $region21: #{logreg_net_forward.1} parent=1 // pred_fallthru
      _
    %v35 = vld [vmem:[#allocation5] sm:$0x1]
    %v36 = vld [vmem:[%s0] sm:$0xff]
    %v37 = vld [vmem:[%s0 + $0x8] sm:$0xff]
    %v38 = vld [vmem:[#allocation2] sm:$0xff]
    %v39 = vld [vmem:[#allocation2 + $0x8] sm:$0xff]
    %v40 = vld [vmem:[#allocation2 + $0x10] sm:$0xff]
    %v41 = vld [vmem:[#allocation2 + $0x18] sm:$0xff]
    %v42 = vld [vmem:[#allocation2 + $0x20] sm:$0xff]
    %v43 = vld [vmem:[#allocation2 + $0x28] sm:$0xff]
    %v44 = vld [vmem:[#allocation2 + $0x30] sm:$0xff]
    %v45 = vld [vmem:[#allocation2 + $0x38] sm:$0xff]
    %v46 = vld [vmem:[#allocation2 + $0x40] sm:$0xff]
    %v47 = vld [vmem:[#allocation2 + $0x48] sm:$0xff]
    %v48 = vld [vmem:[#allocation2 + $0x50] sm:$0xff]
    %v49 = vld [vmem:[#allocation2 + $0x58] sm:$0xff]
    %v50 = vld [vmem:[#allocation2 + $0x60] sm:$0xff]
    %v51 = vld [vmem:[#allocation2 + $0x68] sm:$0xff]
    %v52 = vld [vmem:[#allocation2 + $0x70] sm:$0xff]
    %v53 = vld [vmem:[#allocation2 + $0x78] sm:$0xff]
    %v54 = vld [vmem:[#allocation2 + $0x80] sm:$0xff]
    %v55 = vld [vmem:[#allocation2 + $0x88] sm:$0xff]
    %v56 = vld [vmem:[#allocation2 + $0x90] sm:$0xff]
    %v57 = vld [vmem:[#allocation2 + $0x98] sm:$0xff]
    %v58 = vld [vmem:[#allocation2 + $0xa0] sm:$0xff]
    %v59 = vld [vmem:[#allocation2 + $0xa8] sm:$0xff]
    %v60 = vld [vmem:[#allocation2 + $0xb0] sm:$0xff]
    %v61 = vld [vmem:[#allocation2 + $0xb8] sm:$0xff]
    %v62 = vld [vmem:[#allocation2 + $0xc0] sm:$0xff]
    %v63 = vld [vmem:[#allocation2 + $0xc8] sm:$0xff]
    %v64 = vld [vmem:[#allocation2 + $0xd0] sm:$0xff]
    %v65 = vld [vmem:[#allocation2 + $0xd8] sm:$0xff]
    %v66 = vld [vmem:[#allocation2 + $0xe0] sm:$0xff]
    %v67 = vld [vmem:[#allocation2 + $0xe8] sm:$0xff]
    %v68 = vld [vmem:[#allocation2 + $0xf0] sm:$0xff]
    %v69 = vld [vmem:[#allocation2 + $0xf8] sm:$0xff]
    %v70 = vld [vmem:[#allocation2 + $0x100] sm:$0xff]
    %v71 = vld [vmem:[#allocation2 + $0x108] sm:$0xff]
    %v72 = vld [vmem:[#allocation2 + $0x110] sm:$0xff]
    %v73 = vld [vmem:[#allocation2 + $0x118] sm:$0xff]
    %v74 = vld [vmem:[#allocation2 + $0x120] sm:$0xff]
    %v75 = vld [vmem:[#allocation2 + $0x128] sm:$0xff]
    %v76 = vld [vmem:[#allocation2 + $0x130] sm:$0xff]
    %v77 = vld [vmem:[#allocation2 + $0x138] sm:$0xff]
    %v78 = vld [vmem:[#allocation2 + $0x140] sm:$0xff]
    %v79 = vld [vmem:[#allocation2 + $0x148] sm:$0xff]
    %v80 = vld [vmem:[#allocation2 + $0x150] sm:$0xff]
    %v81 = vld [vmem:[#allocation2 + $0x158] sm:$0xff]
    %v82 = vld [vmem:[#allocation2 + $0x160] sm:$0xff]
    %v83 = vld [vmem:[#allocation2 + $0x168] sm:$0xff]
    %v84 = vld [vmem:[#allocation2 + $0x170] sm:$0xff]
    %v85 = vld [vmem:[#allocation2 + $0x178] sm:$0xff]
    %v86 = vld [vmem:[#allocation2 + $0x180] sm:$0xff]
    %v87 = vld [vmem:[#allocation2 + $0x188] sm:$0xff]
    %v88 = vld [vmem:[#allocation2 + $0x190] sm:$0xff]
    %v89 = vld [vmem:[#allocation2 + $0x198] sm:$0xff]
    %v90 = vld [vmem:[#allocation2 + $0x1a0] sm:$0xff]
    %v91 = vld [vmem:[#allocation2 + $0x1a8] sm:$0xff]
    %v92 = vld [vmem:[#allocation2 + $0x1b0] sm:$0xff]
    %v93 = vld [vmem:[#allocation2 + $0x1b8] sm:$0xff]
    %v94 = vld [vmem:[#allocation2 + $0x1c0] sm:$0xff]
    %v95 = vld [vmem:[#allocation2 + $0x1c8] sm:$0xff]
    %v96 = vld [vmem:[#allocation2 + $0x1d0] sm:$0xff]
    %v97 = vld [vmem:[#allocation2 + $0x1d8] sm:$0xff]
    %v98 = vld [vmem:[#allocation2 + $0x1e0] sm:$0xff]
    %v99 = vld [vmem:[#allocation2 + $0x1e8] sm:$0xff]
    %v100 = vld [vmem:[#allocation2 + $0x1f0] sm:$0xff]
    %v101 = vld [vmem:[#allocation2 + $0x1f8] sm:$0xff]
    %v104 = vlaneseq
    %v105 = vshrl.u32 %v104, 7
    %v106 = vsub.s32 0, %v105
    %v107 = vrot.slane %v36, %v106
    %v108 = vlaneseq
    %v109 = vshrl.u32 %v108, 7
    %v110 = vsub.s32 1, %v109
    %v111 = vrot.slane %v36, %v110
    %v112 = vlaneseq
    %v113 = vshrl.u32 %v112, 7
    %v114 = vsub.s32 2, %v113
    %v115 = vrot.slane %v36, %v114
    %v116 = vlaneseq
    %v117 = vshrl.u32 %v116, 7
    %v118 = vsub.s32 3, %v117
    %v119 = vrot.slane %v36, %v118
    %v120 = vlaneseq
    %v121 = vshrl.u32 %v120, 7
    %v122 = vsub.s32 4, %v121
    %v123 = vrot.slane %v36, %v122
    %v124 = vlaneseq
    %v125 = vshrl.u32 %v124, 7
    %v126 = vsub.s32 5, %v125
    %v127 = vrot.slane %v36, %v126
    %v128 = vlaneseq
    %v129 = vshrl.u32 %v128, 7
    %v130 = vsub.s32 6, %v129
    %v131 = vrot.slane %v36, %v130
    %v132 = vlaneseq
    %v133 = vshrl.u32 %v132, 7
    %v134 = vsub.s32 7, %v133
    %v135 = vrot.slane %v36, %v134
    %v136 = vlaneseq
    %v137 = vshrl.u32 %v136, 7
    %v138 = vsub.s32 0, %v137
    %v139 = vrot.slane %v37, %v138
    %v140 = vlaneseq
    %v141 = vshrl.u32 %v140, 7
    %v142 = vsub.s32 1, %v141
    %v143 = vrot.slane %v37, %v142
    %v144 = vlaneseq
    %v145 = vshrl.u32 %v144, 7
    %v146 = vsub.s32 2, %v145
    %v147 = vrot.slane %v37, %v146
    %v148 = vlaneseq
    %v149 = vshrl.u32 %v148, 7
    %v150 = vsub.s32 3, %v149
    %v151 = vrot.slane %v37, %v150
    %v152 = vlaneseq
    %v153 = vshrl.u32 %v152, 7
    %v154 = vsub.s32 4, %v153
    %v155 = vrot.slane %v37, %v154
    %v156 = vlaneseq
    %v157 = vshrl.u32 %v156, 7
    %v158 = vsub.s32 5, %v157
    %v159 = vrot.slane %v37, %v158
    %v160 = vlaneseq
    %v161 = vshrl.u32 %v160, 7
    %v162 = vsub.s32 6, %v161
    %v163 = vrot.slane %v37, %v162
    %v164 = vlaneseq
    %v165 = vshrl.u32 %v164, 7
    %v166 = vsub.s32 7, %v165
    %v167 = vrot.slane %v37, %v166
    %184 = vmatprep.subr.mxu0 %v39
    %185 = vmatpush1.xpose.msra.mxu0 %v38
    %186 = vmatprep.subr.mxu0 %v55
    %187 = vmatpush1.xpose.msra.mxu0 %v54
    %188 = vmatprep.subr.mxu0 %v71
    %189 = vmatpush1.xpose.msra.mxu0 %v70
    %190 = vmatprep.subr.mxu0 %v87
    %191 = vmatpush1.xpose.msra.mxu0 %v86
    %192 = vmatprep.subr.mxu0 0.0
    %193 = vmatpush1.xpose.msra.mxu0 0.0
    %194 = vmatprep.subr.mxu0 0.0
    %195 = vmatpush1.xpose.msra.mxu0 0.0
    %196 = vmatprep.subr.mxu0 0.0
    %197 = vmatpush1.xpose.msra.mxu0 0.0
    %198 = vmatprep.subr.mxu0 0.0
    %199 = vmatpush1.xpose.msra.mxu0 0.0
    %200 = vmatprep.subr.mxu0 0.0
    %201 = vmatpush1.xpose.msra.mxu0 0.0
    %202 = vmatprep.subr.mxu0 0.0
    %203 = vmatpush1.xpose.msra.mxu0 0.0
    %204 = vmatprep.subr.mxu0 0.0
    %205 = vmatpush1.xpose.msra.mxu0 0.0
    %206 = vmatprep.subr.mxu0 0.0
    %207 = vmatpush1.xpose.msra.mxu0 0.0
    %208 = vmatprep.subr.mxu0 0.0
    %209 = vmatpush1.xpose.msra.mxu0 0.0
    %210 = vmatprep.subr.mxu0 0.0
    %211 = vmatpush1.xpose.msra.mxu0 0.0
    %212 = vmatprep.subr.mxu0 0.0
    %213 = vmatpush1.xpose.msra.mxu0 0.0
    %214 = vmatprep.subr.mxu0 0.0
    %215 = vmatpush1.xpose.msra.mxu0 0.0
    %216 = vmatprep.subr.mxu0 0.0
    %217 = vmatpush1.xpose.msra.mxu0 0.0
    %218 = vmatprep.subr.mxu0 0.0
    %219 = vmatpush1.xpose.msra.mxu0 0.0
    %220 = vmatprep.subr.mxu0 0.0
    %221 = vmatpush1.xpose.msra.mxu0 0.0
    %222 = vmatprep.subr.mxu0 0.0
    %223 = vmatpush1.xpose.msra.mxu0 0.0
    %224 = vmatprep.subr.mxu0 0.0
    %225 = vmatpush1.xpose.msra.mxu0 0.0
    %226 = vmatprep.subr.mxu0 0.0
    %227 = vmatpush1.xpose.msra.mxu0 0.0
    %228 = vmatprep.subr.mxu0 0.0
    %229 = vmatpush1.xpose.msra.mxu0 0.0
    %230 = vmatprep.subr.mxu0 0.0
    %231 = vmatpush1.xpose.msra.mxu0 0.0
    %232 = vmatprep.subr.mxu0 0.0
    %233 = vmatpush1.xpose.msra.mxu0 0.0
    %234 = vmatprep.subr.mxu0 0.0
    %235 = vmatpush1.xpose.msra.mxu0 0.0
    %236 = vmatprep.subr.mxu0 0.0
    %237 = vmatpush1.xpose.msra.mxu0 0.0
    %238 = vmatprep.subr.mxu0 0.0
    %239 = vmatpush1.xpose.msra.mxu0 0.0
    %240 = vmatprep.subr.mxu0 0.0
    %241 = vmatpush1.xpose.msra.mxu0 0.0
    %242 = vmatprep.subr.mxu0 0.0
    %243 = vmatpush1.xpose.msra.mxu0 0.0
    %244 = vmatprep.subr.mxu0 0.0
    %245 = vmatpush1.xpose.msra.mxu0 0.0
    %246 = vmatprep.subr.mxu0 0.0
    %247 = vmatpush1.xpose.msra.mxu0 0.0
    %248 = vmatprep.mubr.f32.mxu0 %v111
    %249 = vmatmul.mubr.f32.gmra.mrb[0].mxu0 %v107
    %v250 = vpop.f32.mrb[0].mxu0
    %v251 = vadd.f32 0.0, %v250
    %v252 = vpop.f32.mrb[0].mxu0
    %253 = vdwg.mxu0
    %254 = vmatprep.subr.mxu0 %v41
    %255 = vmatpush1.xpose.msra.mxu0 %v40
    %256 = vmatprep.subr.mxu0 %v57
    %257 = vmatpush1.xpose.msra.mxu0 %v56
    %258 = vmatprep.subr.mxu0 %v73
    %259 = vmatpush1.xpose.msra.mxu0 %v72
    %260 = vmatprep.subr.mxu0 %v89
    %261 = vmatpush1.xpose.msra.mxu0 %v88
    %262 = vmatprep.subr.mxu0 0.0
    %263 = vmatpush1.xpose.msra.mxu0 0.0
    %264 = vmatprep.subr.mxu0 0.0
    %265 = vmatpush1.xpose.msra.mxu0 0.0
    %266 = vmatprep.subr.mxu0 0.0
    %267 = vmatpush1.xpose.msra.mxu0 0.0
    %268 = vmatprep.subr.mxu0 0.0
    %269 = vmatpush1.xpose.msra.mxu0 0.0
    %270 = vmatprep.subr.mxu0 0.0
    %271 = vmatpush1.xpose.msra.mxu0 0.0
    %272 = vmatprep.subr.mxu0 0.0
    %273 = vmatpush1.xpose.msra.mxu0 0.0
    %274 = vmatprep.subr.mxu0 0.0
    %275 = vmatpush1.xpose.msra.mxu0 0.0
    %276 = vmatprep.subr.mxu0 0.0
    %277 = vmatpush1.xpose.msra.mxu0 0.0
    %278 = vmatprep.subr.mxu0 0.0
    %279 = vmatpush1.xpose.msra.mxu0 0.0
    %280 = vmatprep.subr.mxu0 0.0
    %281 = vmatpush1.xpose.msra.mxu0 0.0
    %282 = vmatprep.subr.mxu0 0.0
    %283 = vmatpush1.xpose.msra.mxu0 0.0
    %284 = vmatprep.subr.mxu0 0.0
    %285 = vmatpush1.xpose.msra.mxu0 0.0
    %286 = vmatprep.subr.mxu0 0.0
    %287 = vmatpush1.xpose.msra.mxu0 0.0
    %288 = vmatprep.subr.mxu0 0.0
    %289 = vmatpush1.xpose.msra.mxu0 0.0
    %290 = vmatprep.subr.mxu0 0.0
    %291 = vmatpush1.xpose.msra.mxu0 0.0
    %292 = vmatprep.subr.mxu0 0.0
    %293 = vmatpush1.xpose.msra.mxu0 0.0
    %294 = vmatprep.subr.mxu0 0.0
    %295 = vmatpush1.xpose.msra.mxu0 0.0
    %296 = vmatprep.subr.mxu0 0.0
    %297 = vmatpush1.xpose.msra.mxu0 0.0
    %298 = vmatprep.subr.mxu0 0.0
    %299 = vmatpush1.xpose.msra.mxu0 0.0
    %300 = vmatprep.subr.mxu0 0.0
    %301 = vmatpush1.xpose.msra.mxu0 0.0
    %302 = vmatprep.subr.mxu0 0.0
    %303 = vmatpush1.xpose.msra.mxu0 0.0
    %304 = vmatprep.subr.mxu0 0.0
    %305 = vmatpush1.xpose.msra.mxu0 0.0
    %306 = vmatprep.subr.mxu0 0.0
    %307 = vmatpush1.xpose.msra.mxu0 0.0
    %308 = vmatprep.subr.mxu0 0.0
    %309 = vmatpush1.xpose.msra.mxu0 0.0
    %310 = vmatprep.subr.mxu0 0.0
    %311 = vmatpush1.xpose.msra.mxu0 0.0
    %312 = vmatprep.subr.mxu0 0.0
    %313 = vmatpush1.xpose.msra.mxu0 0.0
    %314 = vmatprep.subr.mxu0 0.0
    %315 = vmatpush1.xpose.msra.mxu0 0.0
    %316 = vmatprep.subr.mxu0 0.0
    %317 = vmatpush1.xpose.msra.mxu0 0.0
    %318 = vmatprep.mubr.f32.mxu0 %v119
    %319 = vmatmul.mubr.f32.gmra.mrb[0].mxu0 %v115
    %v320 = vpop.f32.mrb[0].mxu0
    %v321 = vadd.f32 %v251, %v320
    %v322 = vpop.f32.mrb[0].mxu0
    %323 = vdwg.mxu0
    %324 = vmatprep.subr.mxu0 %v43
    %325 = vmatpush1.xpose.msra.mxu0 %v42
    %326 = vmatprep.subr.mxu0 %v59
    %327 = vmatpush1.xpose.msra.mxu0 %v58
    %328 = vmatprep.subr.mxu0 %v75
    %329 = vmatpush1.xpose.msra.mxu0 %v74
    %330 = vmatprep.subr.mxu0 %v91
    %331 = vmatpush1.xpose.msra.mxu0 %v90
    %332 = vmatprep.subr.mxu0 0.0
    %333 = vmatpush1.xpose.msra.mxu0 0.0
    %334 = vmatprep.subr.mxu0 0.0
    %335 = vmatpush1.xpose.msra.mxu0 0.0
    %336 = vmatprep.subr.mxu0 0.0
    %337 = vmatpush1.xpose.msra.mxu0 0.0
    %338 = vmatprep.subr.mxu0 0.0
    %339 = vmatpush1.xpose.msra.mxu0 0.0
    %340 = vmatprep.subr.mxu0 0.0
    %341 = vmatpush1.xpose.msra.mxu0 0.0
    %342 = vmatprep.subr.mxu0 0.0
    %343 = vmatpush1.xpose.msra.mxu0 0.0
    %344 = vmatprep.subr.mxu0 0.0
    %345 = vmatpush1.xpose.msra.mxu0 0.0
    %346 = vmatprep.subr.mxu0 0.0
    %347 = vmatpush1.xpose.msra.mxu0 0.0
    %348 = vmatprep.subr.mxu0 0.0
    %349 = vmatpush1.xpose.msra.mxu0 0.0
    %350 = vmatprep.subr.mxu0 0.0
    %351 = vmatpush1.xpose.msra.mxu0 0.0
    %352 = vmatprep.subr.mxu0 0.0
    %353 = vmatpush1.xpose.msra.mxu0 0.0
    %354 = vmatprep.subr.mxu0 0.0
    %355 = vmatpush1.xpose.msra.mxu0 0.0
    %356 = vmatprep.subr.mxu0 0.0
    %357 = vmatpush1.xpose.msra.mxu0 0.0
    %358 = vmatprep.subr.mxu0 0.0
    %359 = vmatpush1.xpose.msra.mxu0 0.0
    %360 = vmatprep.subr.mxu0 0.0
    %361 = vmatpush1.xpose.msra.mxu0 0.0
    %362 = vmatprep.subr.mxu0 0.0
    %363 = vmatpush1.xpose.msra.mxu0 0.0
    %364 = vmatprep.subr.mxu0 0.0
    %365 = vmatpush1.xpose.msra.mxu0 0.0
    %366 = vmatprep.subr.mxu0 0.0
    %367 = vmatpush1.xpose.msra.mxu0 0.0
    %368 = vmatprep.subr.mxu0 0.0
    %369 = vmatpush1.xpose.msra.mxu0 0.0
    %370 = vmatprep.subr.mxu0 0.0
    %371 = vmatpush1.xpose.msra.mxu0 0.0
    %372 = vmatprep.subr.mxu0 0.0
    %373 = vmatpush1.xpose.msra.mxu0 0.0
    %374 = vmatprep.subr.mxu0 0.0
    %375 = vmatpush1.xpose.msra.mxu0 0.0
    %376 = vmatprep.subr.mxu0 0.0
    %377 = vmatpush1.xpose.msra.mxu0 0.0
    %378 = vmatprep.subr.mxu0 0.0
    %379 = vmatpush1.xpose.msra.mxu0 0.0
    %380 = vmatprep.subr.mxu0 0.0
    %381 = vmatpush1.xpose.msra.mxu0 0.0
    %382 = vmatprep.subr.mxu0 0.0
    %383 = vmatpush1.xpose.msra.mxu0 0.0
    %384 = vmatprep.subr.mxu0 0.0
    %385 = vmatpush1.xpose.msra.mxu0 0.0
    %386 = vmatprep.subr.mxu0 0.0
    %387 = vmatpush1.xpose.msra.mxu0 0.0
    %388 = vmatprep.mubr.f32.mxu0 %v127
    %389 = vmatmul.mubr.f32.gmra.mrb[0].mxu0 %v123
    %v390 = vpop.f32.mrb[0].mxu0
    %v391 = vadd.f32 %v321, %v390
    %v392 = vpop.f32.mrb[0].mxu0
    %393 = vdwg.mxu0
    %394 = vmatprep.subr.mxu0 %v45
    %395 = vmatpush1.xpose.msra.mxu0 %v44
    %396 = vmatprep.subr.mxu0 %v61
    %397 = vmatpush1.xpose.msra.mxu0 %v60
    %398 = vmatprep.subr.mxu0 %v77
    %399 = vmatpush1.xpose.msra.mxu0 %v76
    %400 = vmatprep.subr.mxu0 %v93
    %401 = vmatpush1.xpose.msra.mxu0 %v92
    %402 = vmatprep.subr.mxu0 0.0
    %403 = vmatpush1.xpose.msra.mxu0 0.0
    %404 = vmatprep.subr.mxu0 0.0
    %405 = vmatpush1.xpose.msra.mxu0 0.0
    %406 = vmatprep.subr.mxu0 0.0
    %407 = vmatpush1.xpose.msra.mxu0 0.0
    %408 = vmatprep.subr.mxu0 0.0
    %409 = vmatpush1.xpose.msra.mxu0 0.0
    %410 = vmatprep.subr.mxu0 0.0
    %411 = vmatpush1.xpose.msra.mxu0 0.0
    %412 = vmatprep.subr.mxu0 0.0
    %413 = vmatpush1.xpose.msra.mxu0 0.0
    %414 = vmatprep.subr.mxu0 0.0
    %415 = vmatpush1.xpose.msra.mxu0 0.0
    %416 = vmatprep.subr.mxu0 0.0
    %417 = vmatpush1.xpose.msra.mxu0 0.0
    %418 = vmatprep.subr.mxu0 0.0
    %419 = vmatpush1.xpose.msra.mxu0 0.0
    %420 = vmatprep.subr.mxu0 0.0
    %421 = vmatpush1.xpose.msra.mxu0 0.0
    %422 = vmatprep.subr.mxu0 0.0
    %423 = vmatpush1.xpose.msra.mxu0 0.0
    %424 = vmatprep.subr.mxu0 0.0
    %425 = vmatpush1.xpose.msra.mxu0 0.0
    %426 = vmatprep.subr.mxu0 0.0
    %427 = vmatpush1.xpose.msra.mxu0 0.0
    %428 = vmatprep.subr.mxu0 0.0
    %429 = vmatpush1.xpose.msra.mxu0 0.0
    %430 = vmatprep.subr.mxu0 0.0
    %431 = vmatpush1.xpose.msra.mxu0 0.0
    %432 = vmatprep.subr.mxu0 0.0
    %433 = vmatpush1.xpose.msra.mxu0 0.0
    %434 = vmatprep.subr.mxu0 0.0
    %435 = vmatpush1.xpose.msra.mxu0 0.0
    %436 = vmatprep.subr.mxu0 0.0
    %437 = vmatpush1.xpose.msra.mxu0 0.0
    %438 = vmatprep.subr.mxu0 0.0
    %439 = vmatpush1.xpose.msra.mxu0 0.0
    %440 = vmatprep.subr.mxu0 0.0
    %441 = vmatpush1.xpose.msra.mxu0 0.0
    %442 = vmatprep.subr.mxu0 0.0
    %443 = vmatpush1.xpose.msra.mxu0 0.0
    %444 = vmatprep.subr.mxu0 0.0
    %445 = vmatpush1.xpose.msra.mxu0 0.0
    %446 = vmatprep.subr.mxu0 0.0
    %447 = vmatpush1.xpose.msra.mxu0 0.0
    %448 = vmatprep.subr.mxu0 0.0
    %449 = vmatpush1.xpose.msra.mxu0 0.0
    %450 = vmatprep.subr.mxu0 0.0
    %451 = vmatpush1.xpose.msra.mxu0 0.0
    %452 = vmatprep.subr.mxu0 0.0
    %453 = vmatpush1.xpose.msra.mxu0 0.0
    %454 = vmatprep.subr.mxu0 0.0
    %455 = vmatpush1.xpose.msra.mxu0 0.0
    %456 = vmatprep.subr.mxu0 0.0
    %457 = vmatpush1.xpose.msra.mxu0 0.0
    %458 = vmatprep.mubr.f32.mxu0 %v135
    %459 = vmatmul.mubr.f32.gmra.mrb[0].mxu0 %v131
    %v460 = vpop.f32.mrb[0].mxu0
    %v461 = vadd.f32 %v391, %v460
    %v462 = vpop.f32.mrb[0].mxu0
    %463 = vdwg.mxu0
    %464 = vmatprep.subr.mxu0 %v47
    %465 = vmatpush1.xpose.msra.mxu0 %v46
    %466 = vmatprep.subr.mxu0 %v63
    %467 = vmatpush1.xpose.msra.mxu0 %v62
    %468 = vmatprep.subr.mxu0 %v79
    %469 = vmatpush1.xpose.msra.mxu0 %v78
    %470 = vmatprep.subr.mxu0 %v95
    %471 = vmatpush1.xpose.msra.mxu0 %v94
    %472 = vmatprep.subr.mxu0 0.0
    %473 = vmatpush1.xpose.msra.mxu0 0.0
    %474 = vmatprep.subr.mxu0 0.0
    %475 = vmatpush1.xpose.msra.mxu0 0.0
    %476 = vmatprep.subr.mxu0 0.0
    %477 = vmatpush1.xpose.msra.mxu0 0.0
    %478 = vmatprep.subr.mxu0 0.0
    %479 = vmatpush1.xpose.msra.mxu0 0.0
    %480 = vmatprep.subr.mxu0 0.0
    %481 = vmatpush1.xpose.msra.mxu0 0.0
    %482 = vmatprep.subr.mxu0 0.0
    %483 = vmatpush1.xpose.msra.mxu0 0.0
    %484 = vmatprep.subr.mxu0 0.0
    %485 = vmatpush1.xpose.msra.mxu0 0.0
    %486 = vmatprep.subr.mxu0 0.0
    %487 = vmatpush1.xpose.msra.mxu0 0.0
    %488 = vmatprep.subr.mxu0 0.0
    %489 = vmatpush1.xpose.msra.mxu0 0.0
    %490 = vmatprep.subr.mxu0 0.0
    %491 = vmatpush1.xpose.msra.mxu0 0.0
    %492 = vmatprep.subr.mxu0 0.0
    %493 = vmatpush1.xpose.msra.mxu0 0.0
    %494 = vmatprep.subr.mxu0 0.0
    %495 = vmatpush1.xpose.msra.mxu0 0.0
    %496 = vmatprep.subr.mxu0 0.0
    %497 = vmatpush1.xpose.msra.mxu0 0.0
    %498 = vmatprep.subr.mxu0 0.0
    %499 = vmatpush1.xpose.msra.mxu0 0.0
    %500 = vmatprep.subr.mxu0 0.0
    %501 = vmatpush1.xpose.msra.mxu0 0.0
    %502 = vmatprep.subr.mxu0 0.0
    %503 = vmatpush1.xpose.msra.mxu0 0.0
    %504 = vmatprep.subr.mxu0 0.0
    %505 = vmatpush1.xpose.msra.mxu0 0.0
    %506 = vmatprep.subr.mxu0 0.0
    %507 = vmatpush1.xpose.msra.mxu0 0.0
    %508 = vmatprep.subr.mxu0 0.0
    %509 = vmatpush1.xpose.msra.mxu0 0.0
    %510 = vmatprep.subr.mxu0 0.0
    %511 = vmatpush1.xpose.msra.mxu0 0.0
    %512 = vmatprep.subr.mxu0 0.0
    %513 = vmatpush1.xpose.msra.mxu0 0.0
    %514 = vmatprep.subr.mxu0 0.0
    %515 = vmatpush1.xpose.msra.mxu0 0.0
    %516 = vmatprep.subr.mxu0 0.0
    %517 = vmatpush1.xpose.msra.mxu0 0.0
    %518 = vmatprep.subr.mxu0 0.0
    %519 = vmatpush1.xpose.msra.mxu0 0.0
    %520 = vmatprep.subr.mxu0 0.0
    %521 = vmatpush1.xpose.msra.mxu0 0.0
    %522 = vmatprep.subr.mxu0 0.0
    %523 = vmatpush1.xpose.msra.mxu0 0.0
    %524 = vmatprep.subr.mxu0 0.0
    %525 = vmatpush1.xpose.msra.mxu0 0.0
    %526 = vmatprep.subr.mxu0 0.0
    %527 = vmatpush1.xpose.msra.mxu0 0.0
    %528 = vmatprep.mubr.f32.mxu0 %v143
    %529 = vmatmul.mubr.f32.gmra.mrb[0].mxu0 %v139
    %v530 = vpop.f32.mrb[0].mxu0
    %v531 = vadd.f32 %v461, %v530
    %v532 = vpop.f32.mrb[0].mxu0
    %533 = vdwg.mxu0
    %534 = vmatprep.subr.mxu0 %v49
    %535 = vmatpush1.xpose.msra.mxu0 %v48
    %536 = vmatprep.subr.mxu0 %v65
    %537 = vmatpush1.xpose.msra.mxu0 %v64
    %538 = vmatprep.subr.mxu0 %v81
    %539 = vmatpush1.xpose.msra.mxu0 %v80
    %540 = vmatprep.subr.mxu0 %v97
    %541 = vmatpush1.xpose.msra.mxu0 %v96
    %542 = vmatprep.subr.mxu0 0.0
    %543 = vmatpush1.xpose.msra.mxu0 0.0
    %544 = vmatprep.subr.mxu0 0.0
    %545 = vmatpush1.xpose.msra.mxu0 0.0
    %546 = vmatprep.subr.mxu0 0.0
    %547 = vmatpush1.xpose.msra.mxu0 0.0
    %548 = vmatprep.subr.mxu0 0.0
    %549 = vmatpush1.xpose.msra.mxu0 0.0
    %550 = vmatprep.subr.mxu0 0.0
    %551 = vmatpush1.xpose.msra.mxu0 0.0
    %552 = vmatprep.subr.mxu0 0.0
    %553 = vmatpush1.xpose.msra.mxu0 0.0
    %554 = vmatprep.subr.mxu0 0.0
    %555 = vmatpush1.xpose.msra.mxu0 0.0
    %556 = vmatprep.subr.mxu0 0.0
    %557 = vmatpush1.xpose.msra.mxu0 0.0
    %558 = vmatprep.subr.mxu0 0.0
    %559 = vmatpush1.xpose.msra.mxu0 0.0
    %560 = vmatprep.subr.mxu0 0.0
    %561 = vmatpush1.xpose.msra.mxu0 0.0
    %562 = vmatprep.subr.mxu0 0.0
    %563 = vmatpush1.xpose.msra.mxu0 0.0
    %564 = vmatprep.subr.mxu0 0.0
    %565 = vmatpush1.xpose.msra.mxu0 0.0
    %566 = vmatprep.subr.mxu0 0.0
    %567 = vmatpush1.xpose.msra.mxu0 0.0
    %568 = vmatprep.subr.mxu0 0.0
    %569 = vmatpush1.xpose.msra.mxu0 0.0
    %570 = vmatprep.subr.mxu0 0.0
    %571 = vmatpush1.xpose.msra.mxu0 0.0
    %572 = vmatprep.subr.mxu0 0.0
    %573 = vmatpush1.xpose.msra.mxu0 0.0
    %574 = vmatprep.subr.mxu0 0.0
    %575 = vmatpush1.xpose.msra.mxu0 0.0
    %576 = vmatprep.subr.mxu0 0.0
    %577 = vmatpush1.xpose.msra.mxu0 0.0
    %578 = vmatprep.subr.mxu0 0.0
    %579 = vmatpush1.xpose.msra.mxu0 0.0
    %580 = vmatprep.subr.mxu0 0.0
    %581 = vmatpush1.xpose.msra.mxu0 0.0
    %582 = vmatprep.subr.mxu0 0.0
    %583 = vmatpush1.xpose.msra.mxu0 0.0
    %584 = vmatprep.subr.mxu0 0.0
    %585 = vmatpush1.xpose.msra.mxu0 0.0
    %586 = vmatprep.subr.mxu0 0.0
    %587 = vmatpush1.xpose.msra.mxu0 0.0
    %588 = vmatprep.subr.mxu0 0.0
    %589 = vmatpush1.xpose.msra.mxu0 0.0
    %590 = vmatprep.subr.mxu0 0.0
    %591 = vmatpush1.xpose.msra.mxu0 0.0
    %592 = vmatprep.subr.mxu0 0.0
    %593 = vmatpush1.xpose.msra.mxu0 0.0
    %594 = vmatprep.subr.mxu0 0.0
    %595 = vmatpush1.xpose.msra.mxu0 0.0
    %596 = vmatprep.subr.mxu0 0.0
    %597 = vmatpush1.xpose.msra.mxu0 0.0
    %598 = vmatprep.mubr.f32.mxu0 %v151
    %599 = vmatmul.mubr.f32.gmra.mrb[0].mxu0 %v147
    %v600 = vpop.f32.mrb[0].mxu0
    %v601 = vadd.f32 %v531, %v600
    %v602 = vpop.f32.mrb[0].mxu0
    %603 = vdwg.mxu0
    %604 = vmatprep.subr.mxu0 %v51
    %605 = vmatpush1.xpose.msra.mxu0 %v50
    %606 = vmatprep.subr.mxu0 %v67
    %607 = vmatpush1.xpose.msra.mxu0 %v66
    %608 = vmatprep.subr.mxu0 %v83
    %609 = vmatpush1.xpose.msra.mxu0 %v82
    %610 = vmatprep.subr.mxu0 %v99
    %611 = vmatpush1.xpose.msra.mxu0 %v98
    %612 = vmatprep.subr.mxu0 0.0
    %613 = vmatpush1.xpose.msra.mxu0 0.0
    %614 = vmatprep.subr.mxu0 0.0
    %615 = vmatpush1.xpose.msra.mxu0 0.0
    %616 = vmatprep.subr.mxu0 0.0
    %617 = vmatpush1.xpose.msra.mxu0 0.0
    %618 = vmatprep.subr.mxu0 0.0
    %619 = vmatpush1.xpose.msra.mxu0 0.0
    %620 = vmatprep.subr.mxu0 0.0
    %621 = vmatpush1.xpose.msra.mxu0 0.0
    %622 = vmatprep.subr.mxu0 0.0
    %623 = vmatpush1.xpose.msra.mxu0 0.0
    %624 = vmatprep.subr.mxu0 0.0
    %625 = vmatpush1.xpose.msra.mxu0 0.0
    %626 = vmatprep.subr.mxu0 0.0
    %627 = vmatpush1.xpose.msra.mxu0 0.0
    %628 = vmatprep.subr.mxu0 0.0
    %629 = vmatpush1.xpose.msra.mxu0 0.0
    %630 = vmatprep.subr.mxu0 0.0
    %631 = vmatpush1.xpose.msra.mxu0 0.0
    %632 = vmatprep.subr.mxu0 0.0
    %633 = vmatpush1.xpose.msra.mxu0 0.0
    %634 = vmatprep.subr.mxu0 0.0
    %635 = vmatpush1.xpose.msra.mxu0 0.0
    %636 = vmatprep.subr.mxu0 0.0
    %637 = vmatpush1.xpose.msra.mxu0 0.0
    %638 = vmatprep.subr.mxu0 0.0
    %639 = vmatpush1.xpose.msra.mxu0 0.0
    %640 = vmatprep.subr.mxu0 0.0
    %641 = vmatpush1.xpose.msra.mxu0 0.0
    %642 = vmatprep.subr.mxu0 0.0
    %643 = vmatpush1.xpose.msra.mxu0 0.0
    %644 = vmatprep.subr.mxu0 0.0
    %645 = vmatpush1.xpose.msra.mxu0 0.0
    %646 = vmatprep.subr.mxu0 0.0
    %647 = vmatpush1.xpose.msra.mxu0 0.0
    %648 = vmatprep.subr.mxu0 0.0
    %649 = vmatpush1.xpose.msra.mxu0 0.0
    %650 = vmatprep.subr.mxu0 0.0
    %651 = vmatpush1.xpose.msra.mxu0 0.0
    %652 = vmatprep.subr.mxu0 0.0
    %653 = vmatpush1.xpose.msra.mxu0 0.0
    %654 = vmatprep.subr.mxu0 0.0
    %655 = vmatpush1.xpose.msra.mxu0 0.0
    %656 = vmatprep.subr.mxu0 0.0
    %657 = vmatpush1.xpose.msra.mxu0 0.0
    %658 = vmatprep.subr.mxu0 0.0
    %659 = vmatpush1.xpose.msra.mxu0 0.0
    %660 = vmatprep.subr.mxu0 0.0
    %661 = vmatpush1.xpose.msra.mxu0 0.0
    %662 = vmatprep.subr.mxu0 0.0
    %663 = vmatpush1.xpose.msra.mxu0 0.0
    %664 = vmatprep.subr.mxu0 0.0
    %665 = vmatpush1.xpose.msra.mxu0 0.0
    %666 = vmatprep.subr.mxu0 0.0
    %667 = vmatpush1.xpose.msra.mxu0 0.0
    %668 = vmatprep.mubr.f32.mxu0 %v159
    %669 = vmatmul.mubr.f32.gmra.mrb[0].mxu0 %v155
    %v670 = vpop.f32.mrb[0].mxu0
    %v671 = vadd.f32 %v601, %v670
    %v672 = vpop.f32.mrb[0].mxu0
    %673 = vdwg.mxu0
    %674 = vmatprep.subr.mxu0 %v53
    %675 = vmatpush1.xpose.msra.mxu0 %v52
    %676 = vmatprep.subr.mxu0 %v69
    %677 = vmatpush1.xpose.msra.mxu0 %v68
    %678 = vmatprep.subr.mxu0 %v85
    %679 = vmatpush1.xpose.msra.mxu0 %v84
    %680 = vmatprep.subr.mxu0 %v101
    %681 = vmatpush1.xpose.msra.mxu0 %v100
    %682 = vmatprep.subr.mxu0 0.0
    %683 = vmatpush1.xpose.msra.mxu0 0.0
    %684 = vmatprep.subr.mxu0 0.0
    %685 = vmatpush1.xpose.msra.mxu0 0.0
    %686 = vmatprep.subr.mxu0 0.0
    %687 = vmatpush1.xpose.msra.mxu0 0.0
    %688 = vmatprep.subr.mxu0 0.0
    %689 = vmatpush1.xpose.msra.mxu0 0.0
    %690 = vmatprep.subr.mxu0 0.0
    %691 = vmatpush1.xpose.msra.mxu0 0.0
    %692 = vmatprep.subr.mxu0 0.0
    %693 = vmatpush1.xpose.msra.mxu0 0.0
    %694 = vmatprep.subr.mxu0 0.0
    %695 = vmatpush1.xpose.msra.mxu0 0.0
    %696 = vmatprep.subr.mxu0 0.0
    %697 = vmatpush1.xpose.msra.mxu0 0.0
    %698 = vmatprep.subr.mxu0 0.0
    %699 = vmatpush1.xpose.msra.mxu0 0.0
    %700 = vmatprep.subr.mxu0 0.0
    %701 = vmatpush1.xpose.msra.mxu0 0.0
    %702 = vmatprep.subr.mxu0 0.0
    %703 = vmatpush1.xpose.msra.mxu0 0.0
    %704 = vmatprep.subr.mxu0 0.0
    %705 = vmatpush1.xpose.msra.mxu0 0.0
    %706 = vmatprep.subr.mxu0 0.0
    %707 = vmatpush1.xpose.msra.mxu0 0.0
    %708 = vmatprep.subr.mxu0 0.0
    %709 = vmatpush1.xpose.msra.mxu0 0.0
    %710 = vmatprep.subr.mxu0 0.0
    %711 = vmatpush1.xpose.msra.mxu0 0.0
    %712 = vmatprep.subr.mxu0 0.0
    %713 = vmatpush1.xpose.msra.mxu0 0.0
    %714 = vmatprep.subr.mxu0 0.0
    %715 = vmatpush1.xpose.msra.mxu0 0.0
    %716 = vmatprep.subr.mxu0 0.0
    %717 = vmatpush1.xpose.msra.mxu0 0.0
    %718 = vmatprep.subr.mxu0 0.0
    %719 = vmatpush1.xpose.msra.mxu0 0.0
    %720 = vmatprep.subr.mxu0 0.0
    %721 = vmatpush1.xpose.msra.mxu0 0.0
    %722 = vmatprep.subr.mxu0 0.0
    %723 = vmatpush1.xpose.msra.mxu0 0.0
    %724 = vmatprep.subr.mxu0 0.0
    %725 = vmatpush1.xpose.msra.mxu0 0.0
    %726 = vmatprep.subr.mxu0 0.0
    %727 = vmatpush1.xpose.msra.mxu0 0.0
    %728 = vmatprep.subr.mxu0 0.0
    %729 = vmatpush1.xpose.msra.mxu0 0.0
    %730 = vmatprep.subr.mxu0 0.0
    %731 = vmatpush1.xpose.msra.mxu0 0.0
    %732 = vmatprep.subr.mxu0 0.0
    %733 = vmatpush1.xpose.msra.mxu0 0.0
    %734 = vmatprep.subr.mxu0 0.0
    %735 = vmatpush1.xpose.msra.mxu0 0.0
    %736 = vmatprep.subr.mxu0 0.0
    %737 = vmatpush1.xpose.msra.mxu0 0.0
    %738 = vmatprep.mubr.f32.mxu0 %v167
    %739 = vmatmul.mubr.f32.gmra.mrb[0].mxu0 %v163
    %v740 = vpop.f32.mrb[0].mxu0
    %v741 = vadd.f32 %v671, %v740
    %v742 = vpop.f32.mrb[0].mxu0
    %743 = vdwg.mxu0
    %v744 = vadd.f32 %v35, %v741
    %vm745 = vcmask 253952
    %746 = vst.msk [vmem:[#allocation5] sm:$0x1] %vm745, %v744
    // Predicated region
    $region22: #{logreg_net_forward.1} parent=1 // pred_check
      %p747 = pneg %p29
    $region23: #{logreg_net_forward.1} parent=1 // pred_check_branch
      %749 = sbr.rel (%p747) target = $region25
    $region24: #{logreg_net_forward.1} parent=1 // pred_region
      %v750 = vld [vmem:[#allocation5] sm:$0x1]
      %v751 = vld [vmem:[%s2] sm:$0x1]
      %v752 = vadd.f32 %v750, %v751
      %v753 = vsel %vm745, %v752, -inf
      %754 = vmax.xlane.f32.xlu0 %v753
      %v755 = vpop.xlane.xlu0 %754
      %v756 = vsub.f32 %v752, %v755
      %v757 = vmul.f32 %v756, 1.442695
      %v758 = vpow.pop %v757
      %v759 = vsel %vm745, %v758, 0.0
      %760 = vadd.xlane.f32.xlu0 %v759
      %v761 = vpop.xlane.xlu0 %760
      %v762 = vrcp.pop %v761
      %v763 = vmul.f32 %v758, %v762
      %764 = vst.msk [vmem:[#allocation5] sm:$0x1] %vm745, %v763
    $region25: #{logreg_net_forward.1} parent=1 // pred_fallthru
      _
    // Predicated region
    $region26: #{logreg_net_forward.1} parent=1 // pred_check
      _
    $region27: #{logreg_net_forward.1} parent=1 // pred_check_branch
      %766 = sbr.rel (0) target = $region29
    $region28: #{logreg_net_forward.1} parent=1 // pred_region
      %s768 = ssub.s32 16, 16
      %769 = vsyncadd [#allocation4], %s768
      %s771 = sshll.u32 [#allocation5], 4
      %s772 = int_to_ptr.vmem [resolvable:$true] %s771
      %774 = dma.vmem_to_hbm [thread:$0]  %s772, 16, %s3, [#allocation4]
    $region29: #{logreg_net_forward.1} parent=1 // pred_fallthru
      _
    // Predicated region
    $region30: #{logreg_net_forward.1} parent=1 // pred_check
      _
    $region31: #{logreg_net_forward.1} parent=1 // pred_check_branch
      %776 = sbr.rel (0) target = $region33
    $region32: #{logreg_net_forward.1} parent=1 // pred_region
      %777 = dma.done [#allocation4], 16
    $region33: #{logreg_net_forward.1} parent=1 // pred_fallthru
      _
    %778 = vsyncpa [#allocation3], 1
    %779 = vsyncpa [#allocation4], 1

</llo_original>
